<compile_context>
chip_gen: v7x
topology: tpu7x:2x2x1
jax: 0.10.0
libtpu: 0.0.40
codegen_flags: <defaults>
</compile_context>

<pallas_src>
import jax
import jax.numpy as jnp
from jax.experimental import pallas as pl
from jax.experimental.pallas import tpu as pltpu


def _upsample_matrix(in_size: int, scale: int) -> jnp.ndarray:
    """Bilinear interpolation matrix, PyTorch align_corners=False semantics.

    src = (dst + 0.5)/scale - 0.5, clamped at 0 on the left; at the right edge
    both taps collapse onto the last input sample (matches PyTorch's
    `i1 = i0 + (i0 < in-1)` rule).
    """
    out_size = in_size * scale
    o = jnp.arange(out_size, dtype=jnp.float32)
    src = (o + 0.5) / float(scale) - 0.5
    src = jnp.maximum(src, 0.0)
    i0 = jnp.clip(jnp.floor(src).astype(jnp.int32), 0, in_size - 1)
    i1 = jnp.clip(i0 + 1, 0, in_size - 1)
    frac = src - i0.astype(jnp.float32)
    rows = jnp.arange(out_size)
    m = jnp.zeros((out_size, in_size), jnp.float32)
    m = m.at[rows, i0].add(1.0 - frac)
    m = m.at[rows, i1].add(frac)
    return m


def _out_conv_kernel(x_ref, mh_ref, mwt_ref, w_ref, b_ref, o_ref):
    tb, C, H, W = x_ref.shape
    Hout = mh_ref.shape[0]
    Wout = mwt_ref.shape[1]

    # (1) 1x1-conv channel reduction FIRST (exact: the 1x1 conv commutes with
    #     the per-channel linear upsample), vectorized over the whole batch
    #     block.  Weights are SMEM scalars -> scalar*vreg multiplies, no
    #     broadcast materialization, bounded live ranges (one (tb,H,W) slab
    #     loaded per channel).
    y = x_ref[:, 0] * w_ref[0]
    for c in range(1, C):
        y = y + x_ref[:, c] * w_ref[c]                      # (tb, H, W)

    # (2) Width upsample: one batch-stacked MXU matmul (M = tb*H).
    t = jnp.dot(y.reshape(tb * H, W), mwt_ref[...],
                preferred_element_type=jnp.float32)          # (tb*H, Wout)

    # (3) Lane-stack the batch block so the height upsample is a single
    #     matmul with a lane-dense result (last dim tb*Wout >= 128).
    t = t.reshape(tb, H, Wout)
    ts = jnp.concatenate([t[i] for i in range(tb)], axis=-1)  # (H, tb*Wout)

    # (4) Height upsample: single MXU matmul, lane-dense output block.
    out = jnp.dot(mh_ref[...], ts,
                  preferred_element_type=jnp.float32)         # (Hout, tb*Wout)

    o_ref[0] = out + b_ref[0]                                 # bias: SMEM scalar


def _rup(a: int, m: int) -> int:
    return (a + m - 1) // m * m


def _block_vmem_bytes(tb, C, H, W, Hout, Wout):
    """Rough per-step VMEM footprint (padded tiles, double-buffered I/O)."""
    f32 = 4
    x_blk = tb * C * _rup(H, 8) * _rup(W, 128) * f32
    o_blk = _rup(Hout, 8) * _rup(tb * Wout, 128) * f32
    mh_blk = _rup(Hout, 8) * _rup(H, 128) * f32
    mw_blk = _rup(W, 8) * _rup(Wout, 128) * f32
    inter = (tb * _rup(H, 8) * _rup(W, 128)
             + _rup(tb * H, 8) * _rup(Wout, 128)
             + 2 * _rup(H, 8) * _rup(tb * Wout, 128)
             + _rup(Hout, 8) * _rup(tb * Wout, 128)) * f32
    return 2 * (x_blk + o_blk + mh_blk + mw_blk) + inter


def _vmem_budget_bytes() -> int:
    try:
        vmem_cap = int(pltpu.get_tpu_info().vmem_capacity_bytes)
    except Exception:
        vmem_cap = 64 * 1024 * 1024       # conservative (v7x) fallback
    return min(40 * 1024 * 1024, (vmem_cap * 3) // 8)


def _pick_batch_block(B, C, H, W, Hout, Wout, budget_bytes):
    # Largest block that fits the VMEM budget; the grid is a serial loop on
    # v5e/v6e, so fewer/fatter steps amortize per-step pipeline overhead.
    best = 1
    for tb in range(1, min(B, 16) + 1):
        if B % tb == 0 and _block_vmem_bytes(tb, C, H, W, Hout, Wout) <= budget_bytes:
            best = tb
    return best


def out_conv(x, weight, bias, scale: int = 4, batch_block=None):
    """x: [B, C, H, W] f32, weight: [1, C, 1, 1], bias: [1] -> [B, 1, 4H, 4W]."""
    B, C, H, W = x.shape
    Hout, Wout = H * scale, W * scale

    budget = _vmem_budget_bytes()
    tb = _pick_batch_block(B, C, H, W, Hout, Wout, budget) \
        if batch_block is None else batch_block
    assert B % tb == 0, "batch_block must divide B"
    G = B // tb

    mh = _upsample_matrix(H, scale)               # (Hout, H)
    mwt = _upsample_matrix(W, scale).T            # (W, Wout)
    w1 = weight.reshape(C).astype(jnp.float32)    # SMEM scalars
    b1 = bias.reshape(1).astype(jnp.float32)      # SMEM scalar

    est = _block_vmem_bytes(tb, C, H, W, Hout, Wout)
    vmem_limit = int(min(48 * 1024 * 1024,
                         max(32 * 1024 * 1024, est + (4 << 20))))

    out = pl.pallas_call(
        _out_conv_kernel,
        out_shape=jax.ShapeDtypeStruct((G, Hout, tb * Wout), jnp.float32),
        grid_spec=pltpu.PrefetchScalarGridSpec(
            num_scalar_prefetch=0,
            grid=(G,),
            in_specs=[
                pl.BlockSpec((tb, C, H, W), lambda g: (g, 0, 0, 0)),
                pl.BlockSpec((Hout, H), lambda g: (0, 0)),
                pl.BlockSpec((W, Wout), lambda g: (0, 0)),
                pl.BlockSpec(memory_space=pltpu.MemorySpace.SMEM),
                pl.BlockSpec(memory_space=pltpu.MemorySpace.SMEM),
            ],
            out_specs=pl.BlockSpec((1, Hout, tb * Wout), lambda g: (g, 0, 0)),
        ),
        compiler_params=pltpu.CompilerParams(
            dimension_semantics=("parallel",),
            vmem_limit_bytes=vmem_limit),
    )(x.astype(jnp.float32), mh, mwt, w1, b1)

    # Un-stack the lane-packed batch block back to NCHW (layout plumbing only).
    out = out.reshape(G, Hout, tb, Wout).transpose(0, 2, 1, 3)
    return out.reshape(B, 1, Hout, Wout)


def _bilinear_upsample_ref(x, scale):
    """Independent gather-based reference for F.interpolate(scale_factor=scale,
    mode='bilinear', align_corners=False) on NCHW input."""
    B, C, H, W = x.shape

    def taps(in_size):
        o = jnp.arange(in_size * scale, dtype=jnp.float32)
        src = jnp.maximum((o + 0.5) / float(scale) - 0.5, 0.0)
        i0 = jnp.clip(jnp.floor(src).astype(jnp.int32), 0, in_size - 1)
        i1 = jnp.minimum(i0 + 1, in_size - 1)
        f = src - i0.astype(jnp.float32)
        return i0, i1, f

    h0, h1, fh = taps(H)
    w0, w1, fw = taps(W)
    fh = fh[None, None, :, None]
    fw = fw[None, None, None, :]

    def g(hi, wi):
        return x[:, :, hi, :][:, :, :, wi]

    top = g(h0, w0) * (1.0 - fw) + g(h0, w1) * fw
    bot = g(h1, w0) * (1.0 - fw) + g(h1, w1) * fw
    return top * (1.0 - fh) + bot * fh


if __name__ == "__main__":
    B, C, H, W = 2, 4, 16, 16
    key = jax.random.PRNGKey(0)
    kx, kw, kb = jax.random.split(key, 3)

    x = jax.random.normal(kx, (B, C, H, W), dtype=jnp.float32)

    # Deterministic init mimicking PyTorch Conv2d defaults:
    # U(-1/sqrt(fan_in), 1/sqrt(fan_in)), fan_in = C for a 1x1 kernel.
    fan_in = C
    bound = 1.0 / (fan_in ** 0.5)
    weight = jax.random.uniform(kw, (1, C, 1, 1), jnp.float32, -bound, bound)
    bias = jax.random.uniform(kb, (1,), jnp.float32, -bound, bound)

    out = jax.block_until_ready(out_conv(x, weight, bias))
    assert out.shape == (B, 1, 4 * H, 4 * W), out.shape

    # Independent reference in the ORIGINAL op order (gather-based bilinear
    # upsample of all channels, then 1x1 conv + bias).  This validates both
    # the conv-first reordering and the interpolation-matrix construction.
    up = _bilinear_upsample_ref(x, 4)
    ref = jnp.einsum("bchw,c->bhw", up, weight.reshape(-1))[:, None] + bias[0]

    err = float(jnp.max(jnp.abs(out - ref)))
    assert jnp.allclose(out, ref, atol=1e-4, rtol=1e-4), err
    print("KERNEL_OK")
</pallas_src>

<mosaic_0001>
module attributes {stable_mosaic.version = 11 : i64} {
  func.func @_out_conv_kernel(%arg0: i32, %arg1: memref<2x4x16x16xf32, #tpu.memory_space<vmem>>, %arg2: memref<64x16xf32, #tpu.memory_space<vmem>>, %arg3: memref<16x64xf32, #tpu.memory_space<vmem>>, %arg4: memref<4xf32, #tpu.memory_space<smem>>, %arg5: memref<1xf32, #tpu.memory_space<smem>>, %arg6: memref<1x64x128xf32, #tpu.memory_space<vmem>>) attributes {dimension_semantics = [#tpu.dimension_semantics<parallel>], iteration_bounds = array<i64: 1>, scalar_prefetch = 0 : i64, scratch_operands = 0 : i64, tpu.core_type = #tpu.core_type<tc>, window_params = [{transform_indices = @transform_0, window_bounds = array<i64: 2, 4, 16, 16>}, {pipeline_mode = #tpu.pipeline_mode<synchronous>, transform_indices = @transform_1, window_bounds = array<i64: 64, 16>}, {pipeline_mode = #tpu.pipeline_mode<synchronous>, transform_indices = @transform_2, window_bounds = array<i64: 16, 64>}, {transform_indices = @transform_3, window_bounds = array<i64: 4>}, {transform_indices = @transform_4, window_bounds = array<i64: 1>}, {transform_indices = @transform_5, window_bounds = array<i64: 1, 64, 128>}]} {
    %c0 = arith.constant 0 : index
    %c0_0 = arith.constant 0 : index
    %c0_1 = arith.constant 0 : index
    %c0_2 = arith.constant 0 : index
    %0 = vector.load %arg1[%c0, %c0_0, %c0_1, %c0_2] : memref<2x4x16x16xf32, #tpu.memory_space<vmem>>, vector<2x1x16x16xf32>
    %1 = vector.shape_cast %0 : vector<2x1x16x16xf32> to vector<2x16x16xf32>
    %c0_3 = arith.constant 0 : index
    %2 = memref.load %arg4[%c0_3] : memref<4xf32, #tpu.memory_space<smem>>
    %3 = vector.broadcast %2 : f32 to vector<2x16x16xf32>
    %4 = arith.mulf %1, %3 : vector<2x16x16xf32>
    %c0_4 = arith.constant 0 : index
    %c1 = arith.constant 1 : index
    %c0_5 = arith.constant 0 : index
    %c0_6 = arith.constant 0 : index
    %5 = vector.load %arg1[%c0_4, %c1, %c0_5, %c0_6] : memref<2x4x16x16xf32, #tpu.memory_space<vmem>>, vector<2x1x16x16xf32>
    %6 = vector.shape_cast %5 : vector<2x1x16x16xf32> to vector<2x16x16xf32>
    %c1_7 = arith.constant 1 : index
    %7 = memref.load %arg4[%c1_7] : memref<4xf32, #tpu.memory_space<smem>>
    %8 = vector.broadcast %7 : f32 to vector<2x16x16xf32>
    %9 = arith.mulf %6, %8 : vector<2x16x16xf32>
    %10 = arith.addf %4, %9 : vector<2x16x16xf32>
    %c0_8 = arith.constant 0 : index
    %c2 = arith.constant 2 : index
    %c0_9 = arith.constant 0 : index
    %c0_10 = arith.constant 0 : index
    %11 = vector.load %arg1[%c0_8, %c2, %c0_9, %c0_10] : memref<2x4x16x16xf32, #tpu.memory_space<vmem>>, vector<2x1x16x16xf32>
    %12 = vector.shape_cast %11 : vector<2x1x16x16xf32> to vector<2x16x16xf32>
    %c2_11 = arith.constant 2 : index
    %13 = memref.load %arg4[%c2_11] : memref<4xf32, #tpu.memory_space<smem>>
    %14 = vector.broadcast %13 : f32 to vector<2x16x16xf32>
    %15 = arith.mulf %12, %14 : vector<2x16x16xf32>
    %16 = arith.addf %10, %15 : vector<2x16x16xf32>
    %c0_12 = arith.constant 0 : index
    %c3 = arith.constant 3 : index
    %c0_13 = arith.constant 0 : index
    %c0_14 = arith.constant 0 : index
    %17 = vector.load %arg1[%c0_12, %c3, %c0_13, %c0_14] : memref<2x4x16x16xf32, #tpu.memory_space<vmem>>, vector<2x1x16x16xf32>
    %18 = vector.shape_cast %17 : vector<2x1x16x16xf32> to vector<2x16x16xf32>
    %c3_15 = arith.constant 3 : index
    %19 = memref.load %arg4[%c3_15] : memref<4xf32, #tpu.memory_space<smem>>
    %20 = vector.broadcast %19 : f32 to vector<2x16x16xf32>
    %21 = arith.mulf %18, %20 : vector<2x16x16xf32>
    %22 = arith.addf %16, %21 : vector<2x16x16xf32>
    %23 = vector.shape_cast %22 : vector<2x16x16xf32> to vector<32x16xf32>
    %c0_16 = arith.constant 0 : index
    %c0_17 = arith.constant 0 : index
    %24 = vector.load %arg3[%c0_16, %c0_17] : memref<16x64xf32, #tpu.memory_space<vmem>>, vector<16x64xf32>
    %cst = arith.constant dense<0.000000e+00> : vector<32x64xf32>
    %25 = tpu.matmul %23, %24, %cst {dimension_numbers = #tpu.dot_dimension_numbers<[1], [0], [0], [1], [0, 0, 1, 1], [], []>} : vector<32x16xf32>, vector<16x64xf32>, vector<32x64xf32> -> vector<32x64xf32>
    %26 = vector.shape_cast %25 : vector<32x64xf32> to vector<2x16x64xf32>
    %27 = vector.extract_strided_slice %26 {offsets = [0, 0, 0], sizes = [1, 16, 64], strides = [1, 1, 1]} : vector<2x16x64xf32> to vector<1x16x64xf32>
    %28 = vector.shape_cast %27 : vector<1x16x64xf32> to vector<16x64xf32>
    %29 = vector.extract_strided_slice %26 {offsets = [1, 0, 0], sizes = [1, 16, 64], strides = [1, 1, 1]} : vector<2x16x64xf32> to vector<1x16x64xf32>
    %30 = vector.shape_cast %29 : vector<1x16x64xf32> to vector<16x64xf32>
    %31 = tpu.concatenate %28, %30 in 1 : vector<16x64xf32>, vector<16x64xf32> -> vector<16x128xf32>
    %c0_18 = arith.constant 0 : index
    %c0_19 = arith.constant 0 : index
    %32 = vector.load %arg2[%c0_18, %c0_19] : memref<64x16xf32, #tpu.memory_space<vmem>>, vector<64x16xf32>
    %cst_20 = arith.constant dense<0.000000e+00> : vector<64x128xf32>
    %33 = tpu.matmul %32, %31, %cst_20 {dimension_numbers = #tpu.dot_dimension_numbers<[1], [0], [0], [1], [0, 0, 1, 1], [], []>} : vector<64x16xf32>, vector<16x128xf32>, vector<64x128xf32> -> vector<64x128xf32>
    %c0_21 = arith.constant 0 : index
    %34 = memref.load %arg5[%c0_21] : memref<1xf32, #tpu.memory_space<smem>>
    %35 = vector.broadcast %34 : f32 to vector<64x128xf32>
    %36 = arith.addf %33, %35 : vector<64x128xf32>
    %c0_22 = arith.constant 0 : index
    %c0_23 = arith.constant 0 : index
    %c0_24 = arith.constant 0 : index
    %37 = vector.load %arg6[%c0_22, %c0_23, %c0_24] : memref<1x64x128xf32, #tpu.memory_space<vmem>>, vector<1x64x128xf32>
    %38 = vector.shape_cast %37 : vector<1x64x128xf32> to vector<64x128xf32>
    %39 = vector.shape_cast %36 : vector<64x128xf32> to vector<1x64x128xf32>
    tpu.vector_store %arg6[%c0_22, %c0_23, %c0_24], %39 {strides = array<i32>} : memref<1x64x128xf32, #tpu.memory_space<vmem>>, vector<1x64x128xf32>,
    return
  }
  func.func @transform_0(%arg0: i32) -> (i32, i32, i32, i32) {
    %c0_i32 = arith.constant 0 : i32
    %c0_i32_0 = arith.constant 0 : i32
    %c0_i32_1 = arith.constant 0 : i32
    %c0_i32_2 = arith.constant 0 : i32
    return %arg0, %c0_i32, %c0_i32_0, %c0_i32_1 : i32, i32, i32, i32
  }
  func.func @transform_1(%arg0: i32) -> (i32, i32) {
    %c0_i32 = arith.constant 0 : i32
    %c0_i32_0 = arith.constant 0 : i32
    %c0_i32_1 = arith.constant 0 : i32
    return %c0_i32, %c0_i32_0 : i32, i32
  }
  func.func @transform_2(%arg0: i32) -> (i32, i32) {
    %c0_i32 = arith.constant 0 : i32
    %c0_i32_0 = arith.constant 0 : i32
    %c0_i32_1 = arith.constant 0 : i32
    return %c0_i32, %c0_i32_0 : i32, i32
  }
  func.func @transform_3(%arg0: i32) -> i32 {
    %c0_i32 = arith.constant 0 : i32
    %c0_i32_0 = arith.constant 0 : i32
    return %c0_i32 : i32
  }
  func.func @transform_4(%arg0: i32) -> i32 {
    %c0_i32 = arith.constant 0 : i32
    %c0_i32_0 = arith.constant 0 : i32
    return %c0_i32 : i32
  }
  func.func @transform_5(%arg0: i32) -> (i32, i32, i32) {
    %c0_i32 = arith.constant 0 : i32
    %c0_i32_0 = arith.constant 0 : i32
    %c0_i32_1 = arith.constant 0 : i32
    return %arg0, %c0_i32, %c0_i32_0 : i32, i32, i32
  }
}

</mosaic_0001>

<llo_original>
// kernel: tpu_custom_call.1
$region0: #{tpu_custom_call.1}
  #allocation0 [shape = 'u32[]', space=smem, size = 0x4, offset = 0x4, fixed_abs, tag = 'smem constant byte address 0x4 - core index']
  #allocation1 [shape = 'u32[144,128]{1,0:T(1,128)}', space=vmem, size = 0x12000, scoped, tag = 'internal scratch']
  #allocation2 [shape = 'f32[1]{0:T(128)S(6)}', space=smem, size = 0x200, scoped, tag = 'scoped memory for tpu_custom_call.1']
  %s0 = inlined_call_operand.hbm [shape: f32[2,4,16,16], index: 0, kind: input, shape index: {}]
  %s1 = inlined_call_operand.vmem [shape: f32[64,16], index: 1, kind: input, shape index: {}]
  %s2 = inlined_call_operand.vmem [shape: f32[16,64], index: 2, kind: input, shape index: {}]
  %s3 = inlined_call_operand.vmem [shape: f32[4], index: 3, kind: input, shape index: {}]
  %s4 = inlined_call_operand.<no memory space> [shape: f32[1], index: 4, kind: input, shape index: {}]
  %s5 = inlined_call_operand.hbm [shape: f32[1,64,128], index: 5, kind: output, shape index: {}]
  %s6 = sld [smem:[#allocation0]]
  $region38: #{tpu_custom_call.1} parent=0
    _
  %s8 = ssub.s32 1, %s6
  %s9 = scalar_select 0, %s8, %s6
  %10 = sst [smem:[#allocation2]] %s4
  $region1: #{tpu_custom_call.1} parent=0
    #allocation3 [shape = 'u8[65536]{0}', space=vmem, size = 0x10000, scoped, tag = 'input window, operand 0, single buffered']
    #allocation4 [shape = 's32[1]{0}', space=sflag, size = 0x4, scoped, tag = 'scoped memory for tpu_custom_call.1']
    #allocation5 [shape = 's32[1]{0}', space=sflag, size = 0x4, scoped, tag = 'scoped memory for tpu_custom_call.1']
    #allocation6 [shape = 's32[1]{0}', space=sflag, size = 0x4, scoped, tag = 'scoped memory for tpu_custom_call.1']
    #allocation7 [shape = 'u8[512]{0}', space=smem, size = 0x200, scoped, tag = 'input window, operand 3, single buffered']
    #allocation8 [shape = 'u8[32768]{0}', space=vmem, size = 0x8000, scoped, tag = 'output window, operand 0, single buffered']
    %11 = vsyncpa [#allocation4], 0
    %12 = vsyncpa [#allocation6], 0
    %13 = vsyncpa [#allocation5], 0
    // Predicated region
    $region2: #{tpu_custom_call.1} parent=1 // pred_check
      _
    $region3: #{tpu_custom_call.1} parent=1 // pred_check_branch
      %15 = sbr.rel (0) target = $region5
    $region4: #{tpu_custom_call.1} parent=1 // pred_region
      %s17 = ssub.s32 2048, 2048
      %18 = vsyncadd [#allocation4], %s17
      %s19 = sshll.u32 [#allocation3], 4
      %s20 = int_to_ptr.vmem [resolvable:$true] %s19
      %25 = dma.hbm_to_vmem [thread:$0]  %s0, 2048, %s20, [#allocation4], 128, 128, 8
    $region5: #{tpu_custom_call.1} parent=1 // pred_fallthru
      _
    // Predicated region
    $region6: #{tpu_custom_call.1} parent=1 // pred_check
      _
    $region7: #{tpu_custom_call.1} parent=1 // pred_check_branch
      %27 = sbr.rel (0) target = $region9
    $region8: #{tpu_custom_call.1} parent=1 // pred_region
      _
    $region9: #{tpu_custom_call.1} parent=1 // pred_fallthru
      _
    // Predicated region
    $region10: #{tpu_custom_call.1} parent=1 // pred_check
      _
    $region11: #{tpu_custom_call.1} parent=1 // pred_check_branch
      %29 = sbr.rel (0) target = $region13
    $region12: #{tpu_custom_call.1} parent=1 // pred_region
      _
    $region13: #{tpu_custom_call.1} parent=1 // pred_fallthru
      _
    // Predicated region
    $region14: #{tpu_custom_call.1} parent=1 // pred_check
      _
    $region15: #{tpu_custom_call.1} parent=1 // pred_check_branch
      %31 = sbr.rel (0) target = $region17
    $region16: #{tpu_custom_call.1} parent=1 // pred_region
      %s33 = ssub.s32 16, 16
      %34 = vsyncadd [#allocation6], %s33
      %s36 = sshll.u32 %s3, 4
      %s37 = int_to_ptr.vmem [resolvable:$true] %s36
      %39 = dma.vmem_to_smem %s37, 16, [#allocation7], [#allocation6]
    $region17: #{tpu_custom_call.1} parent=1 // pred_fallthru
      _
    // Predicated region
    $region18: #{tpu_custom_call.1} parent=1 // pred_check
      _
    $region19: #{tpu_custom_call.1} parent=1 // pred_check_branch
      %41 = sbr.rel (0) target = $region21
    $region20: #{tpu_custom_call.1} parent=1 // pred_region
      _
    $region21: #{tpu_custom_call.1} parent=1 // pred_fallthru
      _
    // Predicated region
    $region22: #{tpu_custom_call.1} parent=1 // pred_check
      _
    $region23: #{tpu_custom_call.1} parent=1 // pred_check_branch
      %43 = sbr.rel (0) target = $region25
    $region24: #{tpu_custom_call.1} parent=1 // pred_region
      %44 = dma.done [#allocation4], 2048
    $region25: #{tpu_custom_call.1} parent=1 // pred_fallthru
      _
    // Predicated region
    $region26: #{tpu_custom_call.1} parent=1 // pred_check
      _
    $region27: #{tpu_custom_call.1} parent=1 // pred_check_branch
      %46 = sbr.rel (0) target = $region29
    $region28: #{tpu_custom_call.1} parent=1 // pred_region
      %47 = dma.done [#allocation6], 16
    $region29: #{tpu_custom_call.1} parent=1 // pred_fallthru
      _
    %48 = sfence
    %v49 = vld [vmem:[#allocation3] sm:$0xff]
    %v50 = vld [vmem:[#allocation3 + $0x8] sm:$0xff]
    %v51 = vld [vmem:[#allocation3 + $0x40] sm:$0xff]
    %v52 = vld [vmem:[#allocation3 + $0x48] sm:$0xff]
    %s53 = sld [smem:[#allocation7]]
    %v54 = vstv %s53
    %v55 = vmul.f32 %v49, %v54
    %v56 = vmul.f32 %v50, %v54
    %v57 = vmul.f32 %v51, %v54
    %v58 = vmul.f32 %v52, %v54
    %s59 = scalar_lea.vmem [#allocation3], 16
    %v60 = vld [vmem:[%s59] sm:$0xff]
    %v61 = vld [vmem:[%s59 + $0x8] sm:$0xff]
    %v62 = vld [vmem:[%s59 + $0x40] sm:$0xff]
    %v63 = vld [vmem:[%s59 + $0x48] sm:$0xff]
    %s64 = sld [smem:[#allocation7 + $0x1]]
    %v65 = vstv %s64
    %v66 = vmul.f32 %v60, %v65
    %v67 = vmul.f32 %v61, %v65
    %v68 = vmul.f32 %v62, %v65
    %v69 = vmul.f32 %v63, %v65
    %v70 = vadd.f32 %v55, %v66
    %v71 = vadd.f32 %v56, %v67
    %v72 = vadd.f32 %v57, %v68
    %v73 = vadd.f32 %v58, %v69
    %s74 = scalar_lea.vmem [#allocation3], 32
    %v75 = vld [vmem:[%s74] sm:$0xff]
    %v76 = vld [vmem:[%s74 + $0x8] sm:$0xff]
    %v77 = vld [vmem:[%s74 + $0x40] sm:$0xff]
    %v78 = vld [vmem:[%s74 + $0x48] sm:$0xff]
    %s79 = sld [smem:[#allocation7 + $0x2]]
    %v80 = vstv %s79
    %v81 = vmul.f32 %v75, %v80
    %v82 = vmul.f32 %v76, %v80
    %v83 = vmul.f32 %v77, %v80
    %v84 = vmul.f32 %v78, %v80
    %v85 = vadd.f32 %v70, %v81
    %v86 = vadd.f32 %v71, %v82
    %v87 = vadd.f32 %v72, %v83
    %v88 = vadd.f32 %v73, %v84
    %s89 = scalar_lea.vmem [#allocation3], 48
    %v90 = vld [vmem:[%s89] sm:$0xff]
    %v91 = vld [vmem:[%s89 + $0x8] sm:$0xff]
    %v92 = vld [vmem:[%s89 + $0x40] sm:$0xff]
    %v93 = vld [vmem:[%s89 + $0x48] sm:$0xff]
    %s94 = sld [smem:[#allocation7 + $0x3]]
    %v95 = vstv %s94
    %v96 = vmul.f32 %v90, %v95
    %v97 = vmul.f32 %v91, %v95
    %v98 = vmul.f32 %v92, %v95
    %v99 = vmul.f32 %v93, %v95
    %v100 = vadd.f32 %v85, %v96
    %v101 = vadd.f32 %v86, %v97
    %v102 = vadd.f32 %v87, %v98
    %v103 = vadd.f32 %v88, %v99
    %v104 = vld [vmem:[%s2] sm:$0xff]
    %v105 = vld [vmem:[%s2 + $0x8] sm:$0xff]
    %vm106 = vcmask 130048
    %v108 = vsel %vm106, %v100, 0
    %v111 = vsel %vm106, %v101, 0
    %v114 = vsel %vm106, %v102, 0
    %v117 = vsel %vm106, %v103, 0
    %119 = vmatprep.subr.mxu0 0.0
    %120 = vmatpush1.msra.mxu0 %v104
    %121 = vmatprep.subr.mxu0 0.0
    %122 = vmatpush1.msra.mxu0 %v105
    %123 = vmatprep.subr.mxu0 0.0
    %124 = vmatpush1.msra.mxu0 0.0
    %125 = vmatprep.subr.mxu0 0.0
    %126 = vmatpush1.msra.mxu0 0.0
    %127 = vmatprep.subr.mxu0 0.0
    %128 = vmatpush1.msra.mxu0 0.0
    %129 = vmatprep.subr.mxu0 0.0
    %130 = vmatpush1.msra.mxu0 0.0
    %131 = vmatprep.subr.mxu0 0.0
    %132 = vmatpush1.msra.mxu0 0.0
    %133 = vmatprep.subr.mxu0 0.0
    %134 = vmatpush1.msra.mxu0 0.0
    %135 = vmatprep.subr.mxu0 0.0
    %136 = vmatpush1.msra.mxu0 0.0
    %137 = vmatprep.subr.mxu0 0.0
    %138 = vmatpush1.msra.mxu0 0.0
    %139 = vmatprep.subr.mxu0 0.0
    %140 = vmatpush1.msra.mxu0 0.0
    %141 = vmatprep.subr.mxu0 0.0
    %142 = vmatpush1.msra.mxu0 0.0
    %143 = vmatprep.subr.mxu0 0.0
    %144 = vmatpush1.msra.mxu0 0.0
    %145 = vmatprep.subr.mxu0 0.0
    %146 = vmatpush1.msra.mxu0 0.0
    %147 = vmatprep.subr.mxu0 0.0
    %148 = vmatpush1.msra.mxu0 0.0
    %149 = vmatprep.subr.mxu0 0.0
    %150 = vmatpush1.msra.mxu0 0.0
    %151 = vmatprep.subr.mxu0 0.0
    %152 = vmatpush1.msra.mxu0 0.0
    %153 = vmatprep.subr.mxu0 0.0
    %154 = vmatpush1.msra.mxu0 0.0
    %155 = vmatprep.subr.mxu0 0.0
    %156 = vmatpush1.msra.mxu0 0.0
    %157 = vmatprep.subr.mxu0 0.0
    %158 = vmatpush1.msra.mxu0 0.0
    %159 = vmatprep.subr.mxu0 0.0
    %160 = vmatpush1.msra.mxu0 0.0
    %161 = vmatprep.subr.mxu0 0.0
    %162 = vmatpush1.msra.mxu0 0.0
    %163 = vmatprep.subr.mxu0 0.0
    %164 = vmatpush1.msra.mxu0 0.0
    %165 = vmatprep.subr.mxu0 0.0
    %166 = vmatpush1.msra.mxu0 0.0
    %167 = vmatprep.subr.mxu0 0.0
    %168 = vmatpush1.msra.mxu0 0.0
    %169 = vmatprep.subr.mxu0 0.0
    %170 = vmatpush1.msra.mxu0 0.0
    %171 = vmatprep.subr.mxu0 0.0
    %172 = vmatpush1.msra.mxu0 0.0
    %173 = vmatprep.subr.mxu0 0.0
    %174 = vmatpush1.msra.mxu0 0.0
    %175 = vmatprep.subr.mxu0 0.0
    %176 = vmatpush1.msra.mxu0 0.0
    %177 = vmatprep.subr.mxu0 0.0
    %178 = vmatpush1.msra.mxu0 0.0
    %179 = vmatprep.subr.mxu0 0.0
    %180 = vmatpush1.msra.mxu0 0.0
    %181 = vmatprep.subr.mxu0 0.0
    %182 = vmatpush1.msra.mxu0 0.0
    %183 = vmatprep.mubr.f32.mxu0 0.0
    %184 = vmatmul.mubr.f32.gmra.mrb[0].mxu0 %v108
    %v185 = vpop.f32.mrb[0].mxu0
    %v186 = vadd.f32 0.0, %v185
    %v187 = vpop.f32.mrb[0].mxu0
    %188 = vmatprep.mubr.f32.mxu0 0.0
    %189 = vmatmul.mubr.f32.gmra.mrb[0].mxu0 %v111
    %v190 = vpop.f32.mrb[0].mxu0
    %v191 = vadd.f32 0.0, %v190
    %v192 = vpop.f32.mrb[0].mxu0
    %193 = vmatprep.mubr.f32.mxu0 0.0
    %194 = vmatmul.mubr.f32.gmra.mrb[0].mxu0 %v114
    %v195 = vpop.f32.mrb[0].mxu0
    %v196 = vadd.f32 0.0, %v195
    %v197 = vpop.f32.mrb[0].mxu0
    %198 = vmatprep.mubr.f32.mxu0 0.0
    %199 = vmatmul.mubr.f32.gmra.mrb[0].mxu0 %v117
    %v200 = vpop.f32.mrb[0].mxu0
    %v201 = vadd.f32 0.0, %v200
    %v202 = vpop.f32.mrb[0].mxu0
    %203 = vdwg.mxu0
    %206 = vrot.lane.b32.xlu0 %v196, 64
    %v207 = vpop.permute.xlu0 %206
    %208 = vrot.lane.b32.xlu0 %v201, 64
    %v209 = vpop.permute.xlu0 %208
    %vm212 = vcmask 523264
    %v213 = vsel %vm212, %v186, %v207
    %v214 = vsel %vm212, %v191, %v209
    %v215 = vld [vmem:[%s1] sm:$0xff]
    %v216 = vld [vmem:[%s1 + $0x8] sm:$0xff]
    %v217 = vld [vmem:[%s1 + $0x10] sm:$0xff]
    %v218 = vld [vmem:[%s1 + $0x18] sm:$0xff]
    %v219 = vld [vmem:[%s1 + $0x20] sm:$0xff]
    %v220 = vld [vmem:[%s1 + $0x28] sm:$0xff]
    %v221 = vld [vmem:[%s1 + $0x30] sm:$0xff]
    %v222 = vld [vmem:[%s1 + $0x38] sm:$0xff]
    %s223 = sld [smem:[#allocation2]]
    %v224 = vstv %s223
    %v226 = vsel %vm106, %v215, 0
    %v229 = vsel %vm106, %v216, 0
    %v232 = vsel %vm106, %v217, 0
    %v235 = vsel %vm106, %v218, 0
    %v238 = vsel %vm106, %v219, 0
    %v241 = vsel %vm106, %v220, 0
    %v244 = vsel %vm106, %v221, 0
    %v247 = vsel %vm106, %v222, 0
    %249 = vmatprep.subr.mxu0 0.0
    %250 = vmatpush1.msra.mxu0 %v213
    %251 = vmatprep.subr.mxu0 0.0
    %252 = vmatpush1.msra.mxu0 %v214
    %253 = vmatprep.subr.mxu0 0.0
    %254 = vmatpush1.msra.mxu0 0.0
    %255 = vmatprep.subr.mxu0 0.0
    %256 = vmatpush1.msra.mxu0 0.0
    %257 = vmatprep.subr.mxu0 0.0
    %258 = vmatpush1.msra.mxu0 0.0
    %259 = vmatprep.subr.mxu0 0.0
    %260 = vmatpush1.msra.mxu0 0.0
    %261 = vmatprep.subr.mxu0 0.0
    %262 = vmatpush1.msra.mxu0 0.0
    %263 = vmatprep.subr.mxu0 0.0
    %264 = vmatpush1.msra.mxu0 0.0
    %265 = vmatprep.subr.mxu0 0.0
    %266 = vmatpush1.msra.mxu0 0.0
    %267 = vmatprep.subr.mxu0 0.0
    %268 = vmatpush1.msra.mxu0 0.0
    %269 = vmatprep.subr.mxu0 0.0
    %270 = vmatpush1.msra.mxu0 0.0
    %271 = vmatprep.subr.mxu0 0.0
    %272 = vmatpush1.msra.mxu0 0.0
    %273 = vmatprep.subr.mxu0 0.0
    %274 = vmatpush1.msra.mxu0 0.0
    %275 = vmatprep.subr.mxu0 0.0
    %276 = vmatpush1.msra.mxu0 0.0
    %277 = vmatprep.subr.mxu0 0.0
    %278 = vmatpush1.msra.mxu0 0.0
    %279 = vmatprep.subr.mxu0 0.0
    %280 = vmatpush1.msra.mxu0 0.0
    %281 = vmatprep.subr.mxu0 0.0
    %282 = vmatpush1.msra.mxu0 0.0
    %283 = vmatprep.subr.mxu0 0.0
    %284 = vmatpush1.msra.mxu0 0.0
    %285 = vmatprep.subr.mxu0 0.0
    %286 = vmatpush1.msra.mxu0 0.0
    %287 = vmatprep.subr.mxu0 0.0
    %288 = vmatpush1.msra.mxu0 0.0
    %289 = vmatprep.subr.mxu0 0.0
    %290 = vmatpush1.msra.mxu0 0.0
    %291 = vmatprep.subr.mxu0 0.0
    %292 = vmatpush1.msra.mxu0 0.0
    %293 = vmatprep.subr.mxu0 0.0
    %294 = vmatpush1.msra.mxu0 0.0
    %295 = vmatprep.subr.mxu0 0.0
    %296 = vmatpush1.msra.mxu0 0.0
    %297 = vmatprep.subr.mxu0 0.0
    %298 = vmatpush1.msra.mxu0 0.0
    %299 = vmatprep.subr.mxu0 0.0
    %300 = vmatpush1.msra.mxu0 0.0
    %301 = vmatprep.subr.mxu0 0.0
    %302 = vmatpush1.msra.mxu0 0.0
    %303 = vmatprep.subr.mxu0 0.0
    %304 = vmatpush1.msra.mxu0 0.0
    %305 = vmatprep.subr.mxu0 0.0
    %306 = vmatpush1.msra.mxu0 0.0
    %307 = vmatprep.subr.mxu0 0.0
    %308 = vmatpush1.msra.mxu0 0.0
    %309 = vmatprep.subr.mxu0 0.0
    %310 = vmatpush1.msra.mxu0 0.0
    %311 = vmatprep.subr.mxu0 0.0
    %312 = vmatpush1.msra.mxu0 0.0
    %313 = vmatprep.mubr.f32.mxu0 0.0
    %314 = vmatmul.mubr.f32.gmra.mrb[0].mxu0 %v226
    %v315 = vpop.f32.mrb[0].mxu0
    %v316 = vadd.f32 %v224, %v315
    %v317 = vpop.f32.mrb[0].mxu0
    %318 = vmatprep.mubr.f32.mxu0 0.0
    %319 = vmatmul.mubr.f32.gmra.mrb[0].mxu0 %v229
    %v320 = vpop.f32.mrb[0].mxu0
    %v321 = vadd.f32 %v224, %v320
    %v322 = vpop.f32.mrb[0].mxu0
    %323 = vmatprep.mubr.f32.mxu0 0.0
    %324 = vmatmul.mubr.f32.gmra.mrb[0].mxu0 %v232
    %v325 = vpop.f32.mrb[0].mxu0
    %v326 = vadd.f32 %v224, %v325
    %v327 = vpop.f32.mrb[0].mxu0
    %328 = vmatprep.mubr.f32.mxu0 0.0
    %329 = vmatmul.mubr.f32.gmra.mrb[0].mxu0 %v235
    %v330 = vpop.f32.mrb[0].mxu0
    %v331 = vadd.f32 %v224, %v330
    %v332 = vpop.f32.mrb[0].mxu0
    %333 = vmatprep.mubr.f32.mxu0 0.0
    %334 = vmatmul.mubr.f32.gmra.mrb[0].mxu0 %v238
    %v335 = vpop.f32.mrb[0].mxu0
    %v336 = vadd.f32 %v224, %v335
    %v337 = vpop.f32.mrb[0].mxu0
    %338 = vmatprep.mubr.f32.mxu0 0.0
    %339 = vmatmul.mubr.f32.gmra.mrb[0].mxu0 %v241
    %v340 = vpop.f32.mrb[0].mxu0
    %v341 = vadd.f32 %v224, %v340
    %v342 = vpop.f32.mrb[0].mxu0
    %343 = vmatprep.mubr.f32.mxu0 0.0
    %344 = vmatmul.mubr.f32.gmra.mrb[0].mxu0 %v244
    %v345 = vpop.f32.mrb[0].mxu0
    %v346 = vadd.f32 %v224, %v345
    %v347 = vpop.f32.mrb[0].mxu0
    %348 = vmatprep.mubr.f32.mxu0 0.0
    %349 = vmatmul.mubr.f32.gmra.mrb[0].mxu0 %v247
    %v350 = vpop.f32.mrb[0].mxu0
    %v351 = vadd.f32 %v224, %v350
    %v352 = vpop.f32.mrb[0].mxu0
    %353 = vdwg.mxu0
    %354 = vst [vmem:[#allocation8] sm:$0xff] %v316
    %355 = vst [vmem:[#allocation8 + $0x8] sm:$0xff] %v321
    %356 = vst [vmem:[#allocation8 + $0x10] sm:$0xff] %v326
    %357 = vst [vmem:[#allocation8 + $0x18] sm:$0xff] %v331
    %358 = vst [vmem:[#allocation8 + $0x20] sm:$0xff] %v336
    %359 = vst [vmem:[#allocation8 + $0x28] sm:$0xff] %v341
    %360 = vst [vmem:[#allocation8 + $0x30] sm:$0xff] %v346
    %361 = vst [vmem:[#allocation8 + $0x38] sm:$0xff] %v351
    // Predicated region
    $region30: #{tpu_custom_call.1} parent=1 // pred_check
      _
    $region31: #{tpu_custom_call.1} parent=1 // pred_check_branch
      %363 = sbr.rel (0) target = $region33
    $region32: #{tpu_custom_call.1} parent=1 // pred_region
      %s365 = ssub.s32 1024, 1024
      %366 = vsyncadd [#allocation5], %s365
      %s367 = sshll.u32 [#allocation8], 4
      %s368 = int_to_ptr.vmem [resolvable:$true] %s367
      %373 = dma.vmem_to_hbm [thread:$0]  %s368, 1024, %s5, [#allocation5], 128, 128, 8
    $region33: #{tpu_custom_call.1} parent=1 // pred_fallthru
      _
    // Predicated region
    $region34: #{tpu_custom_call.1} parent=1 // pred_check
      _
    $region35: #{tpu_custom_call.1} parent=1 // pred_check_branch
      %375 = sbr.rel (0) target = $region37
    $region36: #{tpu_custom_call.1} parent=1 // pred_region
      %376 = dma.done [#allocation5], 1024
    $region37: #{tpu_custom_call.1} parent=1 // pred_fallthru
      _
    %377 = vsyncpa [#allocation4], 1
    %378 = vsyncpa [#allocation5], 1
    %379 = vsyncpa [#allocation6], 1

</llo_original>
